<compile_context>
chip_gen: v7x
topology: tpu7x:2x2x1
jax: 0.10.0
libtpu: 0.0.40
codegen_flags: <defaults>
</compile_context>

<pallas_src>
import functools

import jax
import jax.numpy as jnp
from jax.experimental import pallas as pl
from jax.experimental.pallas import tpu as pltpu


def _abs_pos_emb_kernel(x_ref, pos_ref, tab_ref, gamma_ref, beta_ref, o_ref,
                        *, eps: float, use_ln: bool):
    x = x_ref[...].astype(jnp.float32)          # (tm, D)
    pos = pos_ref[...]                          # (tm, 1) int32
    tab = tab_ref[...]                          # (P, D)  embedding table (VMEM-resident)
    tm = x.shape[0]
    num_pos = tab.shape[0]

    # Embedding gather as a one-hot matmul on the MXU: rows of `tab` selected by `pos`.
    iota = jax.lax.broadcasted_iota(jnp.int32, (tm, num_pos), 1)
    onehot = (iota == pos).astype(tab.dtype)                            # (tm, P)
    emb = jnp.dot(onehot, tab, preferred_element_type=jnp.float32)      # (tm, D)

    y = x + emb
    if use_ln:
        mean = jnp.mean(y, axis=-1, keepdims=True)
        centered = y - mean
        var = jnp.mean(centered * centered, axis=-1, keepdims=True)
        y = centered * jax.lax.rsqrt(var + eps)
        y = y * gamma_ref[...].astype(jnp.float32) + beta_ref[...].astype(jnp.float32)
    o_ref[...] = y.astype(o_ref.dtype)


def absolute_positional_embeddings(
    x: jax.Array,                      # (B, S, D)
    table: jax.Array,                  # (max_position_embeddings, D)
    gamma: jax.Array | None = None,    # (D,)  LayerNorm weight
    beta: jax.Array | None = None,     # (D,)  LayerNorm bias
    input_pos: jax.Array | None = None,  # (B, S) int
    *,
    eps: float = 1e-5,
    use_pos_layer_norm: bool = True,
    block_rows: int = 256,
) -> jax.Array:
    """Pallas implementation of AbsolutePositionalEmbeddings.forward(x, input_pos)."""
    B, S, D = x.shape
    P = table.shape[0]

    if input_pos is None:
        input_pos = jnp.broadcast_to(jnp.arange(S, dtype=jnp.int32)[None, :], (B, S))
    input_pos = input_pos.astype(jnp.int32)

    rows = B * S
    x2 = x.reshape(rows, D)
    pos2 = input_pos.reshape(rows, 1)

    def _round_up(a: int, m: int) -> int:
        return ((a + m - 1) // m) * m

    # Row tile: multiple of 8 sublanes, capped at `block_rows`; pad rows so the
    # grid always has whole tiles (keeps the auto double-buffered pipeline).
    tm = _round_up(min(block_rows, _round_up(rows, 8)), 8)
    rows_p = _round_up(rows, tm)
    if rows_p != rows:
        x2 = jnp.pad(x2, ((0, rows_p - rows), (0, 0)))
        pos2 = jnp.pad(pos2, ((0, rows_p - rows), (0, 0)))  # pad index 0 is valid; sliced off below
    grid = (rows_p // tm,)

    if gamma is None:
        gamma = jnp.ones((D,), dtype=table.dtype)
    if beta is None:
        beta = jnp.zeros((D,), dtype=table.dtype)
    gamma2 = gamma.reshape(1, D)
    beta2 = beta.reshape(1, D)

    kernel = functools.partial(_abs_pos_emb_kernel, eps=eps, use_ln=use_pos_layer_norm)

    out2 = pl.pallas_call(
        kernel,
        out_shape=jax.ShapeDtypeStruct((rows_p, D), x.dtype),
        grid_spec=pltpu.PrefetchScalarGridSpec(
            num_scalar_prefetch=0,
            grid=grid,
            in_specs=[
                pl.BlockSpec((tm, D), lambda i: (i, 0)),   # x rows (streamed)
                pl.BlockSpec((tm, 1), lambda i: (i, 0)),   # positions (tiny)
                pl.BlockSpec((P, D), lambda i: (0, 0)),    # full embedding table (resident)
                pl.BlockSpec((1, D), lambda i: (0, 0)),    # LayerNorm gamma
                pl.BlockSpec((1, D), lambda i: (0, 0)),    # LayerNorm beta
            ],
            out_specs=pl.BlockSpec((tm, D), lambda i: (i, 0)),
        ),
        compiler_params=pltpu.CompilerParams(
            dimension_semantics=("parallel",),
        ),
    )(x2, pos2, table, gamma2, beta2)

    return out2[:rows].reshape(B, S, D)


if __name__ == "__main__":
    key = jax.random.PRNGKey(0)
    kx, kt, kg, kb = jax.random.split(key, 4)

    # Small shapes consistent with the module: batch=2, seq=8, hidden=32, max_pos=16.
    B, S, D = 2, 8, 32
    MAX_POS = 16
    EPS = 1e-5

    x = jax.random.normal(kx, (B, S, D), dtype=jnp.float32)
    table = jax.random.normal(kt, (MAX_POS, D), dtype=jnp.float32) * 0.02
    gamma = 1.0 + 0.1 * jax.random.normal(kg, (D,), dtype=jnp.float32)
    beta = 0.1 * jax.random.normal(kb, (D,), dtype=jnp.float32)

    # Default path: input_pos = None -> arange(S) expanded over batch (as in the torch module).
    out = absolute_positional_embeddings(
        x, table, gamma, beta, input_pos=None, eps=EPS, use_pos_layer_norm=True
    )
    out = jax.block_until_ready(out)

    # Plain-JAX reference of the torch forward.
    pos = jnp.broadcast_to(jnp.arange(S, dtype=jnp.int32)[None, :], (B, S))
    pe = table[pos]                                   # (B, S, D)
    y = x + pe
    mean = y.mean(-1, keepdims=True)
    var = ((y - mean) ** 2).mean(-1, keepdims=True)
    ref = (y - mean) / jnp.sqrt(var + EPS) * gamma + beta

    assert out.shape == ref.shape and out.dtype == ref.dtype
    assert jnp.allclose(out, ref, atol=1e-5, rtol=1e-5), "mismatch vs reference"

    print("KERNEL_OK")
</pallas_src>

<mosaic_0001>
module attributes {stable_mosaic.version = 11 : i64} {
  func.func @_abs_pos_emb_kernel(%arg0: i32, %arg1: memref<16x32xf32, #tpu.memory_space<vmem>>, %arg2: memref<16x1xi32, #tpu.memory_space<vmem>>, %arg3: memref<16x32xf32, #tpu.memory_space<vmem>>, %arg4: memref<1x32xf32, #tpu.memory_space<vmem>>, %arg5: memref<1x32xf32, #tpu.memory_space<vmem>>, %arg6: memref<16x32xf32, #tpu.memory_space<vmem>>) attributes {dimension_semantics = [#tpu.dimension_semantics<parallel>], iteration_bounds = array<i64: 1>, scalar_prefetch = 0 : i64, scratch_operands = 0 : i64, tpu.core_type = #tpu.core_type<tc>, window_params = [{transform_indices = @transform_0, window_bounds = array<i64: 16, 32>}, {transform_indices = @transform_1, window_bounds = array<i64: 16, 1>}, {pipeline_mode = #tpu.pipeline_mode<synchronous>, transform_indices = @transform_2, window_bounds = array<i64: 16, 32>}, {pipeline_mode = #tpu.pipeline_mode<synchronous>, transform_indices = @transform_3, window_bounds = array<i64: 1, 32>}, {pipeline_mode = #tpu.pipeline_mode<synchronous>, transform_indices = @transform_4, window_bounds = array<i64: 1, 32>}, {transform_indices = @transform_5, window_bounds = array<i64: 16, 32>}]} {
    %c0 = arith.constant 0 : index
    %c0_0 = arith.constant 0 : index
    %0 = vector.load %arg1[%c0, %c0_0] : memref<16x32xf32, #tpu.memory_space<vmem>>, vector<16x32xf32>
    %c0_1 = arith.constant 0 : index
    %c0_2 = arith.constant 0 : index
    %1 = vector.load %arg2[%c0_1, %c0_2] : memref<16x1xi32, #tpu.memory_space<vmem>>, vector<16x1xi32>
    %c0_3 = arith.constant 0 : index
    %c0_4 = arith.constant 0 : index
    %2 = vector.load %arg3[%c0_3, %c0_4] : memref<16x32xf32, #tpu.memory_space<vmem>>, vector<16x32xf32>
    %3 = tpu.iota {dimensions = array<i32: 1>} : vector<16x16xi32>
    %4 = vector.broadcast %1 : vector<16x1xi32> to vector<16x16xi32>
    %5 = arith.cmpi eq, %3, %4 : vector<16x16xi32>
    %6 = arith.extui %5 : vector<16x16xi1> to vector<16x16xi32>
    %7 = arith.sitofp %6 : vector<16x16xi32> to vector<16x16xf32>
    %cst = arith.constant dense<0.000000e+00> : vector<16x32xf32>
    %8 = tpu.matmul %7, %2, %cst {dimension_numbers = #tpu.dot_dimension_numbers<[1], [0], [0], [1], [0, 0, 1, 1], [], []>} : vector<16x16xf32>, vector<16x32xf32>, vector<16x32xf32> -> vector<16x32xf32>
    %9 = arith.addf %0, %8 : vector<16x32xf32>
    %cst_5 = arith.constant dense<0.000000e+00> : vector<16xf32>
    %10 = vector.multi_reduction <add>, %9, %cst_5 [1] : vector<16x32xf32> to vector<16xf32>
    %11 = vector.shape_cast %10 : vector<16xf32> to vector<16x1xf32>
    %cst_6 = arith.constant 3.200000e+01 : f32
    %12 = vector.broadcast %cst_6 : f32 to vector<16x1xf32>
    %13 = arith.divf %11, %12 : vector<16x1xf32>
    %14 = vector.broadcast %13 : vector<16x1xf32> to vector<16x32xf32>
    %15 = arith.subf %9, %14 : vector<16x32xf32>
    %16 = arith.mulf %15, %15 : vector<16x32xf32>
    %cst_7 = arith.constant dense<0.000000e+00> : vector<16xf32>
    %17 = vector.multi_reduction <add>, %16, %cst_7 [1] : vector<16x32xf32> to vector<16xf32>
    %18 = vector.shape_cast %17 : vector<16xf32> to vector<16x1xf32>
    %cst_8 = arith.constant 3.200000e+01 : f32
    %19 = vector.broadcast %cst_8 : f32 to vector<16x1xf32>
    %20 = arith.divf %18, %19 : vector<16x1xf32>
    %cst_9 = arith.constant 9.99999974E-6 : f32
    %21 = vector.broadcast %cst_9 : f32 to vector<16x1xf32>
    %22 = arith.addf %20, %21 : vector<16x1xf32>
    %23 = math.rsqrt %22 : vector<16x1xf32>
    %24 = vector.broadcast %23 : vector<16x1xf32> to vector<16x32xf32>
    %25 = arith.mulf %15, %24 : vector<16x32xf32>
    %c0_10 = arith.constant 0 : index
    %c0_11 = arith.constant 0 : index
    %26 = vector.load %arg4[%c0_10, %c0_11] : memref<1x32xf32, #tpu.memory_space<vmem>>, vector<1x32xf32>
    %27 = vector.broadcast %26 : vector<1x32xf32> to vector<16x32xf32>
    %28 = arith.mulf %25, %27 : vector<16x32xf32>
    %c0_12 = arith.constant 0 : index
    %c0_13 = arith.constant 0 : index
    %29 = vector.load %arg5[%c0_12, %c0_13] : memref<1x32xf32, #tpu.memory_space<vmem>>, vector<1x32xf32>
    %30 = vector.broadcast %29 : vector<1x32xf32> to vector<16x32xf32>
    %31 = arith.addf %28, %30 : vector<16x32xf32>
    %c0_14 = arith.constant 0 : index
    %c0_15 = arith.constant 0 : index
    %32 = vector.load %arg6[%c0_14, %c0_15] : memref<16x32xf32, #tpu.memory_space<vmem>>, vector<16x32xf32>
    tpu.vector_store %arg6[%c0_14, %c0_15], %31 {strides = array<i32>} : memref<16x32xf32, #tpu.memory_space<vmem>>, vector<16x32xf32>,
    return
  }
  func.func @transform_0(%arg0: i32) -> (i32, i32) {
    %c0_i32 = arith.constant 0 : i32
    %c0_i32_0 = arith.constant 0 : i32
    return %arg0, %c0_i32 : i32, i32
  }
  func.func @transform_1(%arg0: i32) -> (i32, i32) {
    %c0_i32 = arith.constant 0 : i32
    %c0_i32_0 = arith.constant 0 : i32
    return %arg0, %c0_i32 : i32, i32
  }
  func.func @transform_2(%arg0: i32) -> (i32, i32) {
    %c0_i32 = arith.constant 0 : i32
    %c0_i32_0 = arith.constant 0 : i32
    %c0_i32_1 = arith.constant 0 : i32
    return %c0_i32, %c0_i32_0 : i32, i32
  }
  func.func @transform_3(%arg0: i32) -> (i32, i32) {
    %c0_i32 = arith.constant 0 : i32
    %c0_i32_0 = arith.constant 0 : i32
    %c0_i32_1 = arith.constant 0 : i32
    return %c0_i32, %c0_i32_0 : i32, i32
  }
  func.func @transform_4(%arg0: i32) -> (i32, i32) {
    %c0_i32 = arith.constant 0 : i32
    %c0_i32_0 = arith.constant 0 : i32
    %c0_i32_1 = arith.constant 0 : i32
    return %c0_i32, %c0_i32_0 : i32, i32
  }
  func.func @transform_5(%arg0: i32) -> (i32, i32) {
    %c0_i32 = arith.constant 0 : i32
    %c0_i32_0 = arith.constant 0 : i32
    return %arg0, %c0_i32 : i32, i32
  }
}

</mosaic_0001>

<llo_original>
// kernel: tpu_custom_call.1
$region0: #{tpu_custom_call.1}
  #allocation0 [shape = 'u32[]', space=smem, size = 0x4, offset = 0x4, fixed_abs, tag = 'smem constant byte address 0x4 - core index']
  #allocation1 [shape = 'u32[144,128]{1,0:T(1,128)}', space=vmem, size = 0x12000, scoped, tag = 'internal scratch']
  %s0 = inlined_call_operand.vmem [shape: f32[16,32], index: 0, kind: input, shape index: {}]
  %s1 = inlined_call_operand.vmem [shape: s32[16,1], index: 1, kind: input, shape index: {}]
  %s2 = inlined_call_operand.hbm [shape: f32[16,32], index: 2, kind: input, shape index: {}]
  %s3 = inlined_call_operand.vmem [shape: f32[1,32], index: 3, kind: input, shape index: {}]
  %s4 = inlined_call_operand.vmem [shape: f32[1,32], index: 4, kind: input, shape index: {}]
  %s5 = inlined_call_operand.hbm [shape: f32[16,32], index: 5, kind: output, shape index: {}]
  %s6 = sld [smem:[#allocation0]]
  $region34: #{tpu_custom_call.1} parent=0
    _
  %s8 = ssub.s32 1, %s6
  %s9 = scalar_select 0, %s8, %s6
  $region1: #{tpu_custom_call.1} parent=0
    #allocation2 [shape = 'u8[8192]{0}', space=vmem, size = 0x2000, scoped, tag = 'input window, operand 2, single buffered']
    #allocation3 [shape = 's32[1]{0}', space=sflag, size = 0x4, scoped, tag = 'scoped memory for tpu_custom_call.1']
    #allocation4 [shape = 's32[1]{0}', space=sflag, size = 0x4, scoped, tag = 'scoped memory for tpu_custom_call.1']
    #allocation5 [shape = 'u8[8192]{0}', space=vmem, size = 0x2000, scoped, tag = 'output window, operand 0, single buffered']
    %10 = vsyncpa [#allocation3], 0
    %11 = vsyncpa [#allocation4], 0
    // Predicated region
    $region2: #{tpu_custom_call.1} parent=1 // pred_check
      _
    $region3: #{tpu_custom_call.1} parent=1 // pred_check_branch
      %13 = sbr.rel (0) target = $region5
    $region4: #{tpu_custom_call.1} parent=1 // pred_region
      _
    $region5: #{tpu_custom_call.1} parent=1 // pred_fallthru
      _
    // Predicated region
    $region6: #{tpu_custom_call.1} parent=1 // pred_check
      _
    $region7: #{tpu_custom_call.1} parent=1 // pred_check_branch
      %15 = sbr.rel (0) target = $region9
    $region8: #{tpu_custom_call.1} parent=1 // pred_region
      _
    $region9: #{tpu_custom_call.1} parent=1 // pred_fallthru
      _
    // Predicated region
    $region10: #{tpu_custom_call.1} parent=1 // pred_check
      _
    $region11: #{tpu_custom_call.1} parent=1 // pred_check_branch
      %17 = sbr.rel (0) target = $region13
    $region12: #{tpu_custom_call.1} parent=1 // pred_region
      %s19 = ssub.s32 256, 256
      %20 = vsyncadd [#allocation3], %s19
      %s21 = sshll.u32 [#allocation2], 4
      %s22 = int_to_ptr.vmem [resolvable:$true] %s21
      %27 = dma.hbm_to_vmem [thread:$0]  %s2, 256, %s22, [#allocation3], 128, 128, 8
    $region13: #{tpu_custom_call.1} parent=1 // pred_fallthru
      _
    // Predicated region
    $region14: #{tpu_custom_call.1} parent=1 // pred_check
      _
    $region15: #{tpu_custom_call.1} parent=1 // pred_check_branch
      %29 = sbr.rel (0) target = $region17
    $region16: #{tpu_custom_call.1} parent=1 // pred_region
      _
    $region17: #{tpu_custom_call.1} parent=1 // pred_fallthru
      _
    // Predicated region
    $region18: #{tpu_custom_call.1} parent=1 // pred_check
      _
    $region19: #{tpu_custom_call.1} parent=1 // pred_check_branch
      %31 = sbr.rel (0) target = $region21
    $region20: #{tpu_custom_call.1} parent=1 // pred_region
      _
    $region21: #{tpu_custom_call.1} parent=1 // pred_fallthru
      _
    // Predicated region
    $region22: #{tpu_custom_call.1} parent=1 // pred_check
      _
    $region23: #{tpu_custom_call.1} parent=1 // pred_check_branch
      %33 = sbr.rel (0) target = $region25
    $region24: #{tpu_custom_call.1} parent=1 // pred_region
      %34 = dma.done [#allocation3], 256
    $region25: #{tpu_custom_call.1} parent=1 // pred_fallthru
      _
    %v35 = vld [vmem:[%s0] sm:$0xff]
    %v36 = vld [vmem:[%s0 + $0x8] sm:$0xff]
    %v37 = vld [vmem:[%s1] sm:$0xff]
    %v38 = vld [vmem:[%s1 + $0x8] sm:$0xff]
    %v39 = vld [vmem:[#allocation2] sm:$0xff]
    %v40 = vld [vmem:[#allocation2 + $0x8] sm:$0xff]
    %v41 = vlaneseq
    %v42 = vand.u32 %v41, 127
    %43 = vset.pattern.permute.xlu0 0
    %44 = vperm.xlu0 %43, %v37
    %v45 = vpop.permute.xlu0 %44
    %46 = vset.pattern.permute.xlu0 0
    %47 = vperm.xlu0 %46, %v38
    %v48 = vpop.permute.xlu0 %47
    %vm49 = vcmp.eq.s32.totalorder %v42, %v45
    %vm50 = vcmp.eq.s32.totalorder %v42, %v48
    %v51 = vsel %vm49, 1, 0
    %v52 = vsel %vm50, 1, 0
    %v53 = vcvt.s32.f32 %v51
    %v54 = vcvt.s32.f32 %v52
    %vm55 = vcmask 130048
    %v57 = vsel %vm55, %v53, 0
    %v60 = vsel %vm55, %v54, 0
    %62 = vmatprep.subr.mxu0 0.0
    %63 = vmatpush1.msra.mxu0 %v39
    %64 = vmatprep.subr.mxu0 0.0
    %65 = vmatpush1.msra.mxu0 %v40
    %66 = vmatprep.subr.mxu0 0.0
    %67 = vmatpush1.msra.mxu0 0.0
    %68 = vmatprep.subr.mxu0 0.0
    %69 = vmatpush1.msra.mxu0 0.0
    %70 = vmatprep.subr.mxu0 0.0
    %71 = vmatpush1.msra.mxu0 0.0
    %72 = vmatprep.subr.mxu0 0.0
    %73 = vmatpush1.msra.mxu0 0.0
    %74 = vmatprep.subr.mxu0 0.0
    %75 = vmatpush1.msra.mxu0 0.0
    %76 = vmatprep.subr.mxu0 0.0
    %77 = vmatpush1.msra.mxu0 0.0
    %78 = vmatprep.subr.mxu0 0.0
    %79 = vmatpush1.msra.mxu0 0.0
    %80 = vmatprep.subr.mxu0 0.0
    %81 = vmatpush1.msra.mxu0 0.0
    %82 = vmatprep.subr.mxu0 0.0
    %83 = vmatpush1.msra.mxu0 0.0
    %84 = vmatprep.subr.mxu0 0.0
    %85 = vmatpush1.msra.mxu0 0.0
    %86 = vmatprep.subr.mxu0 0.0
    %87 = vmatpush1.msra.mxu0 0.0
    %88 = vmatprep.subr.mxu0 0.0
    %89 = vmatpush1.msra.mxu0 0.0
    %90 = vmatprep.subr.mxu0 0.0
    %91 = vmatpush1.msra.mxu0 0.0
    %92 = vmatprep.subr.mxu0 0.0
    %93 = vmatpush1.msra.mxu0 0.0
    %94 = vmatprep.subr.mxu0 0.0
    %95 = vmatpush1.msra.mxu0 0.0
    %96 = vmatprep.subr.mxu0 0.0
    %97 = vmatpush1.msra.mxu0 0.0
    %98 = vmatprep.subr.mxu0 0.0
    %99 = vmatpush1.msra.mxu0 0.0
    %100 = vmatprep.subr.mxu0 0.0
    %101 = vmatpush1.msra.mxu0 0.0
    %102 = vmatprep.subr.mxu0 0.0
    %103 = vmatpush1.msra.mxu0 0.0
    %104 = vmatprep.subr.mxu0 0.0
    %105 = vmatpush1.msra.mxu0 0.0
    %106 = vmatprep.subr.mxu0 0.0
    %107 = vmatpush1.msra.mxu0 0.0
    %108 = vmatprep.subr.mxu0 0.0
    %109 = vmatpush1.msra.mxu0 0.0
    %110 = vmatprep.subr.mxu0 0.0
    %111 = vmatpush1.msra.mxu0 0.0
    %112 = vmatprep.subr.mxu0 0.0
    %113 = vmatpush1.msra.mxu0 0.0
    %114 = vmatprep.subr.mxu0 0.0
    %115 = vmatpush1.msra.mxu0 0.0
    %116 = vmatprep.subr.mxu0 0.0
    %117 = vmatpush1.msra.mxu0 0.0
    %118 = vmatprep.subr.mxu0 0.0
    %119 = vmatpush1.msra.mxu0 0.0
    %120 = vmatprep.subr.mxu0 0.0
    %121 = vmatpush1.msra.mxu0 0.0
    %122 = vmatprep.subr.mxu0 0.0
    %123 = vmatpush1.msra.mxu0 0.0
    %124 = vmatprep.subr.mxu0 0.0
    %125 = vmatpush1.msra.mxu0 0.0
    %126 = vmatprep.mubr.f32.mxu0 0.0
    %127 = vmatmul.mubr.f32.gmra.mrb[0].mxu0 %v57
    %v128 = vpop.f32.mrb[0].mxu0
    %v129 = vadd.f32 0.0, %v128
    %v130 = vpop.f32.mrb[0].mxu0
    %131 = vmatprep.mubr.f32.mxu0 0.0
    %132 = vmatmul.mubr.f32.gmra.mrb[0].mxu0 %v60
    %v133 = vpop.f32.mrb[0].mxu0
    %v134 = vadd.f32 0.0, %v133
    %v135 = vpop.f32.mrb[0].mxu0
    %136 = vdwg.mxu0
    %v137 = vadd.f32 %v35, %v129
    %v138 = vadd.f32 %v36, %v134
    %vm139 = vcmask 261120
    %v140 = vsel %vm139, %v137, 0.0
    %141 = vadd.xlane.f32.xlu0 %v140
    %v142 = vpop.xlane.xlu0 %141
    %v143 = vsel %vm139, %v138, 0.0
    %144 = vadd.xlane.f32.xlu0 %v143
    %v145 = vpop.xlane.xlu0 %144
    %v146 = vrcp.pop 32.0
    %v147 = vmul.f32 %v142, %v146
    %v148 = vmul.f32 %v145, %v146
    %v149 = vsub.f32 %v137, %v147
    %v150 = vsub.f32 %v138, %v148
    %v151 = vmul.f32 %v149, %v149
    %v152 = vmul.f32 %v150, %v150
    %v153 = vsel %vm139, %v151, 0.0
    %154 = vadd.xlane.f32.xlu0 %v153
    %v155 = vpop.xlane.xlu0 %154
    %v156 = vsel %vm139, %v152, 0.0
    %157 = vadd.xlane.f32.xlu0 %v156
    %v158 = vpop.xlane.xlu0 %157
    %v159 = vmul.f32 %v155, %v146
    %v160 = vmul.f32 %v158, %v146
    %v161 = vadd.f32 %v159, 1e-05
    %v162 = vadd.f32 %v160, 1e-05
    %v163 = vrsqrt.pop %v161
    %v164 = vrsqrt.pop %v162
    %v165 = vmul.f32 %v149, %v163
    %v166 = vmul.f32 %v150, %v164
    %v167 = vld [vmem:[%s3] sm:$0x1]
    %v169 = vlaneseq
    %v170 = vshrl.u32 %v169, 7
    %v171 = vsub.s32 0, %v170
    %v172 = vrot.slane %v167, %v171
    %v174 = vmul.f32 %v165, %v172
    %v175 = vmul.f32 %v166, %v172
    %v176 = vld [vmem:[%s4] sm:$0x1]
    %v178 = vlaneseq
    %v179 = vshrl.u32 %v178, 7
    %v180 = vsub.s32 0, %v179
    %v181 = vrot.slane %v176, %v180
    %v183 = vadd.f32 %v174, %v181
    %v184 = vadd.f32 %v175, %v181
    %185 = vst.msk [vmem:[#allocation5] sm:$0xff] %vm139, %v183
    %186 = vst.msk [vmem:[#allocation5 + $0x8] sm:$0xff] %vm139, %v184
    // Predicated region
    $region26: #{tpu_custom_call.1} parent=1 // pred_check
      _
    $region27: #{tpu_custom_call.1} parent=1 // pred_check_branch
      %188 = sbr.rel (0) target = $region29
    $region28: #{tpu_custom_call.1} parent=1 // pred_region
      %s190 = ssub.s32 256, 256
      %191 = vsyncadd [#allocation4], %s190
      %s192 = sshll.u32 [#allocation5], 4
      %s193 = int_to_ptr.vmem [resolvable:$true] %s192
      %198 = dma.vmem_to_hbm [thread:$0]  %s193, 256, %s5, [#allocation4], 128, 128, 8
    $region29: #{tpu_custom_call.1} parent=1 // pred_fallthru
      _
    // Predicated region
    $region30: #{tpu_custom_call.1} parent=1 // pred_check
      _
    $region31: #{tpu_custom_call.1} parent=1 // pred_check_branch
      %200 = sbr.rel (0) target = $region33
    $region32: #{tpu_custom_call.1} parent=1 // pred_region
      %201 = dma.done [#allocation4], 256
    $region33: #{tpu_custom_call.1} parent=1 // pred_fallthru
      _
    %202 = vsyncpa [#allocation3], 1
    %203 = vsyncpa [#allocation4], 1

</llo_original>
